<compile_context>
chip_gen: v5e
topology: v5e:2x2
jax: 0.10.0
libtpu: 0.0.40
codegen_flags: <defaults>
</compile_context>

<pallas_src>
from functools import partial

import jax
import jax.numpy as jnp
from jax.experimental import pallas as pl
from jax.experimental.pallas import tpu as pltpu

_MiB = 1024 * 1024

# Per-generation tiling / VMEM budgets.
#   block_target : target bytes for one (TB, C, HW) activation block
#   base_limit   : default vmem_limit_bytes handed to Mosaic
#   hard_cap     : never request more scoped VMEM than this
#   min_steps    : minimum number of grid steps to aim for (megacore overlap)
_GEN_PARAMS = {
    "v5e":     dict(block_target=12 * _MiB, base_limit=96 * _MiB, hard_cap=112 * _MiB, min_steps=1),
    "v6e":     dict(block_target=12 * _MiB, base_limit=96 * _MiB, hard_cap=112 * _MiB, min_steps=1),
    "v7x":     dict(block_target=5 * _MiB,  base_limit=48 * _MiB, hard_cap=56 * _MiB,  min_steps=4),
    "unknown": dict(block_target=6 * _MiB,  base_limit=48 * _MiB, hard_cap=56 * _MiB,  min_steps=2),
}


def _tpu_generation():
    try:
        kind = jax.devices()[0].device_kind.lower()
    except Exception:  # pragma: no cover - defensive; assume TPU backend
        return "unknown"
    if "v7" in kind:
        return "v7x"
    if "v6" in kind or "trillium" in kind:
        return "v6e"
    if "v5" in kind:
        return "v5e"
    return "unknown"


def _choose_tb(B, tb_max, min_steps, prefer_even_steps):
    """Largest divisor of B that fits the block budget and step constraints."""
    tb_max = max(1, min(tb_max, B))
    if min_steps > 1 and B >= min_steps:
        tb_max = max(1, min(tb_max, B // min_steps))
    divisors = [t for t in range(1, tb_max + 1) if B % t == 0]
    if prefer_even_steps:
        even = [t for t in divisors if (B // t) % 2 == 0]
        if even:
            return max(even)
    return max(divisors)


def _se_kernel(x_ref, w1_ref, w2_ref, o_ref, *, inv_hw):
    # x_ref/o_ref: (TB, C, HW) — channels on sublanes, spatial on lanes.
    # "Squeeze": spatial mean accumulated in f32 straight off the ref
    # (no f32 copy of the whole block stays live).
    m = jnp.sum(x_ref[...], axis=-1, dtype=jnp.float32) * inv_hw            # (TB, C)
    h = jnp.dot(m, w1_ref[...], preferred_element_type=jnp.float32)         # (TB, Hd)
    h = h * jax.nn.sigmoid(h)                                               # SiLU
    g = jax.nn.sigmoid(
        jnp.dot(h, w2_ref[...], preferred_element_type=jnp.float32))        # (TB, C)
    # "Excite": broadcast the gate over spatial lanes in x's native dtype.
    o_ref[...] = x_ref[...] * g.astype(o_ref.dtype)[:, :, None]


def squeeze_excitation(x, w1, w2):
    """x: (B, C, H, W); w1: (C, hidden); w2: (hidden, C). Returns (B, C, H, W)."""
    B, C, H, W = x.shape
    HW = H * W
    hidden = w1.shape[1]
    itemsize = x.dtype.itemsize

    gen = _tpu_generation()
    cfg = _GEN_PARAMS[gen]

    # Free reshape (same layout); no pad, no transpose, no de-pad slice.
    x_k = x.reshape(B, C, HW)

    # Batch tile: as large as the per-generation block budget allows (up to
    # 256), chosen as a divisor of B so the grid covers the array exactly.
    per_sample = C * HW * itemsize
    tb_max = min(256, max(1, cfg["block_target"] // per_sample))
    tb = _choose_tb(B, tb_max, cfg["min_steps"], prefer_even_steps=(gen == "v7x"))

    block = (tb, C, HW)
    block_bytes = tb * per_sample
    w_bytes = w1.size * w1.dtype.itemsize + w2.size * w2.dtype.itemsize
    # 2x input + 2x output pipeline buffers + (double-buffered) weights + slack.
    needed = 4 * block_bytes + 4 * w_bytes + 2 * _MiB
    vmem_limit = int(min(max(cfg["base_limit"], needed), cfg["hard_cap"]))

    x_bytes = B * per_sample
    cost = pl.CostEstimate(
        flops=4 * B * C * hidden + 2 * B * C * HW,       # 2 matmuls + mean + excite
        transcendentals=2 * B * (hidden + C),            # sigmoids on the EUP
        bytes_accessed=2 * x_bytes + w_bytes,            # bandwidth-bound hint
    )

    out = pl.pallas_call(
        partial(_se_kernel, inv_hw=1.0 / HW),
        out_shape=jax.ShapeDtypeStruct((B, C, HW), x.dtype),
        grid_spec=pltpu.PrefetchScalarGridSpec(
            num_scalar_prefetch=0,
            grid=(B // tb,),
            in_specs=[
                pl.BlockSpec(block, lambda b: (b, 0, 0)),
                # Weights: constant block index -> DMA'd once, stay resident.
                pl.BlockSpec(w1.shape, lambda b: (0, 0)),
                pl.BlockSpec(w2.shape, lambda b: (0, 0)),
            ],
            out_specs=pl.BlockSpec(block, lambda b: (b, 0, 0)),
        ),
        compiler_params=pltpu.CompilerParams(
            dimension_semantics=("parallel",),
            vmem_limit_bytes=vmem_limit),
        cost_estimate=cost,
    )(x_k, w1, w2)

    return out.reshape(B, C, H, W)


def _reference(x, w1, w2):
    m = jnp.mean(x, axis=(2, 3))                 # (B, C)
    h = m @ w1
    h = h * jax.nn.sigmoid(h)                    # SiLU
    g = jax.nn.sigmoid(h @ w2)                   # (B, C)
    return x * g[:, :, None, None]


if __name__ == "__main__":
    # --- Case 1: early-stage-like shape. dim=C=16, shrinkage 0.25.
    B, C, H, W = 2, 16, 16, 16
    hidden = int(C * 0.25)
    kx, k1, k2 = jax.random.split(jax.random.PRNGKey(0), 3)
    x = jax.random.normal(kx, (B, C, H, W), dtype=jnp.float32)
    # nn.Linear(dim, hidden, bias=False).weight is (hidden, dim); y = m @ W.T,
    # so we store the transposed (dim, hidden) / (hidden, dim) operands directly.
    w1 = jax.random.normal(k1, (C, hidden), dtype=jnp.float32) * 0.1
    w2 = jax.random.normal(k2, (hidden, C), dtype=jnp.float32) * 0.1

    out = squeeze_excitation(x, w1, w2)
    jax.block_until_ready(out)
    ref = _reference(x, w1, w2)
    assert out.shape == (B, C, H, W)
    assert jnp.allclose(out, ref, atol=1e-4, rtol=1e-4), "mismatch (case 1)"

    # --- Case 2: late-stage-like shape (HW=49, not a multiple of 128 -> masked
    # stores inside the kernel, no wrapper pad/transpose).
    B2, C2, H2, W2 = 4, 128, 7, 7
    hidden2 = int(C2 * 0.25)
    kx2, k12, k22 = jax.random.split(jax.random.PRNGKey(1), 3)
    x2 = jax.random.normal(kx2, (B2, C2, H2, W2), dtype=jnp.float32)
    w12 = jax.random.normal(k12, (C2, hidden2), dtype=jnp.float32) * 0.1
    w22 = jax.random.normal(k22, (hidden2, C2), dtype=jnp.float32) * 0.1

    out2 = squeeze_excitation(x2, w12, w22)
    jax.block_until_ready(out2)
    ref2 = _reference(x2, w12, w22)
    assert out2.shape == (B2, C2, H2, W2)
    # Slightly looser tolerance: the 128-wide contraction amplifies
    # MXU-vs-XLA matmul rounding differences; layout/indexing bugs would
    # show up as O(1) errors and still be caught.
    assert jnp.allclose(out2, ref2, atol=1e-3, rtol=1e-3), "mismatch (case 2)"

    print("KERNEL_OK")
</pallas_src>

<mosaic_0001>
module attributes {stable_mosaic.version = 11 : i64} {
  func.func @_se_kernel(%arg0: i32, %arg1: memref<1x16x256xf32, #tpu.memory_space<vmem>>, %arg2: memref<16x4xf32, #tpu.memory_space<vmem>>, %arg3: memref<4x16xf32, #tpu.memory_space<vmem>>, %arg4: memref<1x16x256xf32, #tpu.memory_space<vmem>>) attributes {dimension_semantics = [#tpu.dimension_semantics<parallel>], iteration_bounds = array<i64: 2>, scalar_prefetch = 0 : i64, scratch_operands = 0 : i64, tpu.core_type = #tpu.core_type<tc>, window_params = [{transform_indices = @transform_0, window_bounds = array<i64: 1, 16, 256>}, {pipeline_mode = #tpu.pipeline_mode<synchronous>, transform_indices = @transform_1, window_bounds = array<i64: 16, 4>}, {pipeline_mode = #tpu.pipeline_mode<synchronous>, transform_indices = @transform_2, window_bounds = array<i64: 4, 16>}, {transform_indices = @transform_3, window_bounds = array<i64: 1, 16, 256>}]} {
    %c0 = arith.constant 0 : index
    %c0_0 = arith.constant 0 : index
    %c0_1 = arith.constant 0 : index
    %0 = vector.load %arg1[%c0, %c0_0, %c0_1] : memref<1x16x256xf32, #tpu.memory_space<vmem>>, vector<1x16x256xf32>
    %cst = arith.constant dense<0.000000e+00> : vector<1x16xf32>
    %1 = vector.multi_reduction <add>, %0, %cst [2] : vector<1x16x256xf32> to vector<1x16xf32>
    %cst_2 = arith.constant 3.906250e-03 : f32
    %2 = vector.broadcast %cst_2 : f32 to vector<1x16xf32>
    %3 = arith.mulf %1, %2 : vector<1x16xf32>
    %c0_3 = arith.constant 0 : index
    %c0_4 = arith.constant 0 : index
    %4 = vector.load %arg2[%c0_3, %c0_4] : memref<16x4xf32, #tpu.memory_space<vmem>>, vector<16x4xf32>
    %cst_5 = arith.constant dense<0.000000e+00> : vector<1x4xf32>
    %5 = tpu.matmul %3, %4, %cst_5 {dimension_numbers = #tpu.dot_dimension_numbers<[1], [0], [0], [1], [0, 0, 1, 1], [], []>} : vector<1x16xf32>, vector<16x4xf32>, vector<1x4xf32> -> vector<1x4xf32>
    %6 = arith.negf %5 : vector<1x4xf32>
    %7 = math.exp %6 : vector<1x4xf32>
    %cst_6 = arith.constant 1.000000e+00 : f32
    %8 = vector.broadcast %cst_6 : f32 to vector<1x4xf32>
    %9 = arith.addf %8, %7 : vector<1x4xf32>
    %10 = arith.divf %8, %9 : vector<1x4xf32>
    %11 = arith.mulf %5, %10 : vector<1x4xf32>
    %c0_7 = arith.constant 0 : index
    %c0_8 = arith.constant 0 : index
    %12 = vector.load %arg3[%c0_7, %c0_8] : memref<4x16xf32, #tpu.memory_space<vmem>>, vector<4x16xf32>
    %cst_9 = arith.constant dense<0.000000e+00> : vector<1x16xf32>
    %13 = tpu.matmul %11, %12, %cst_9 {dimension_numbers = #tpu.dot_dimension_numbers<[1], [0], [0], [1], [0, 0, 1, 1], [], []>} : vector<1x4xf32>, vector<4x16xf32>, vector<1x16xf32> -> vector<1x16xf32>
    %14 = arith.negf %13 : vector<1x16xf32>
    %15 = math.exp %14 : vector<1x16xf32>
    %cst_10 = arith.constant 1.000000e+00 : f32
    %16 = vector.broadcast %cst_10 : f32 to vector<1x16xf32>
    %17 = arith.addf %16, %15 : vector<1x16xf32>
    %18 = arith.divf %16, %17 : vector<1x16xf32>
    %c0_11 = arith.constant 0 : index
    %c0_12 = arith.constant 0 : index
    %c0_13 = arith.constant 0 : index
    %19 = vector.load %arg1[%c0_11, %c0_12, %c0_13] : memref<1x16x256xf32, #tpu.memory_space<vmem>>, vector<1x16x256xf32>
    %20 = vector.shape_cast %18 : vector<1x16xf32> to vector<1x16x1xf32>
    %21 = vector.broadcast %20 : vector<1x16x1xf32> to vector<1x16x256xf32>
    %22 = arith.mulf %19, %21 : vector<1x16x256xf32>
    %c0_14 = arith.constant 0 : index
    %c0_15 = arith.constant 0 : index
    %c0_16 = arith.constant 0 : index
    %23 = vector.load %arg4[%c0_14, %c0_15, %c0_16] : memref<1x16x256xf32, #tpu.memory_space<vmem>>, vector<1x16x256xf32>
    tpu.vector_store %arg4[%c0_14, %c0_15, %c0_16], %22 {strides = array<i32>} : memref<1x16x256xf32, #tpu.memory_space<vmem>>, vector<1x16x256xf32>,
    return
  }
  func.func @transform_0(%arg0: i32) -> (i32, i32, i32) {
    %c0_i32 = arith.constant 0 : i32
    %c0_i32_0 = arith.constant 0 : i32
    %c0_i32_1 = arith.constant 0 : i32
    return %arg0, %c0_i32, %c0_i32_0 : i32, i32, i32
  }
  func.func @transform_1(%arg0: i32) -> (i32, i32) {
    %c0_i32 = arith.constant 0 : i32
    %c0_i32_0 = arith.constant 0 : i32
    %c0_i32_1 = arith.constant 0 : i32
    return %c0_i32, %c0_i32_0 : i32, i32
  }
  func.func @transform_2(%arg0: i32) -> (i32, i32) {
    %c0_i32 = arith.constant 0 : i32
    %c0_i32_0 = arith.constant 0 : i32
    %c0_i32_1 = arith.constant 0 : i32
    return %c0_i32, %c0_i32_0 : i32, i32
  }
  func.func @transform_3(%arg0: i32) -> (i32, i32, i32) {
    %c0_i32 = arith.constant 0 : i32
    %c0_i32_0 = arith.constant 0 : i32
    %c0_i32_1 = arith.constant 0 : i32
    return %arg0, %c0_i32, %c0_i32_0 : i32, i32, i32
  }
}

</mosaic_0001>

<llo_original>
// kernel: tpu_custom_call.1
$region0: #{tpu_custom_call.1}
  #allocation0 [shape = 'u32[]', space=smem, size = 0x4, offset = 0x4, fixed_abs, tag = 'smem constant byte address 0x4 - core index']
  #allocation1 [shape = 'u32[72,128]{1,0:T(1,128)}', space=vmem, size = 0x9000, scoped, tag = 'internal scratch']
  %s0 = inlined_call_operand.hbm [shape: f32[2,16,256], index: 0, kind: input, shape index: {}]
  %s1 = inlined_call_operand.vmem [shape: f32[16,4], index: 1, kind: input, shape index: {}]
  %s2 = inlined_call_operand.vmem [shape: f32[4,16], index: 2, kind: input, shape index: {}]
  %s3 = inlined_call_operand.hbm [shape: f32[2,16,256], index: 3, kind: output, shape index: {}]
  %s4 = sld [smem:[#allocation0]]
  $region49: #{tpu_custom_call.1} parent=0
    _
  %s6 = ssub.s32 1, %s4
  %s7 = scalar_select 0, %s6, %s4
  $region1: #{tpu_custom_call.1} parent=0
    #allocation2 [shape = 'u8[32768]{0}', space=vmem, size = 0x8000, scoped, tag = 'input window, operand 0']
    #allocation3 [shape = 's32[2]{0}', space=sflag, size = 0x8, scoped, tag = 'scoped memory for tpu_custom_call.1']
    #allocation4 [shape = 's32[2]{0}', space=sflag, size = 0x8, scoped, tag = 'scoped memory for tpu_custom_call.1']
    #allocation5 [shape = 'u8[32768]{0}', space=vmem, size = 0x8000, scoped, tag = 'output window, operand 0']
    %8 = vsyncpa [#allocation3], 0
    %s9 = scalar_lea.sflag [#allocation3], 1
    %10 = vsyncpa %s9, 0
    %11 = vsyncpa [#allocation4], 0
    %s12 = scalar_lea.sflag [#allocation4], 1
    %13 = vsyncpa %s12, 0
    loop: start=0, step=1, limit=4
    $region2: #{tpu_custom_call.1} parent=1 // loop_pre_header
      _
    $region3: #{tpu_custom_call.1} parent=1 // loop_header
      %s15 = sphi 0, %s19
      %p16 = scmp.ge.s32.totalorder %s15, 4
      %s25 = sphi 0, %s27
      %s28 = sphi 0, %s25
      %s29 = sphi 0, %s28
      %s45 = sphi 0, %s29
      %s49 = sphi 0, %s49
      %s51 = sphi 0, %s49
      %s52 = sphi 0, %s51
      %s66 = sphi 0, %s52
      %s70 = sphi 0, %s70
      %s72 = sphi 0, %s70
      %s73 = sphi 0, %s72
      %s87 = sphi 0, %s73
      %s93 = sphi 0, %s95
      %s96 = sphi 0, %s93
      %s97 = sphi 0, %s96
      %s113 = sphi 0, %s97
    $region4: #{tpu_custom_call.1} parent=1 // loop_header_branch
      %18 = sbr.rel (%p16) target = $region8
    $region5: #{tpu_custom_call.1} parent=1 // loop_body
      %s20 = ssub.s32 %s15, 1
      %s21 = ssub.s32 %s15, 2
      %s22 = sadd.s32 %s15, 1
      %s23 = ssub.s32 %s15, %s22
      %p24 = scmp.eq.s32.totalorder %s23, 0
      %s26 = sadd.s32 %s25, 1
      %s27 = scalar_select %p24, %s25, %s26
      %p30 = pneg %p24
      %p31 = scmp.eq.s32.totalorder %s15, 1
      %p32 = por %p30, %p31
      %p33 = scmp.ne.s32.totalorder %s25, %s28
      %p34 = scmp.eq.s32.totalorder %s15, 0
      %p35 = por %p33, %p34
      %p36 = scmp.ne.s32.totalorder %s25, %s28
      %p37 = scmp.eq.s32.totalorder %s20, 1
      %p38 = por %p36, %p37
      %p39 = scmp.ne.s32.totalorder %s28, %s29
      %p40 = scmp.eq.s32.totalorder %s20, 0
      %p41 = por %p39, %p40
      %p42 = scmp.ne.s32.totalorder %s28, %s29
      %p43 = scmp.eq.s32.totalorder %s21, 1
      %p44 = por %p42, %p43
      %p46 = scmp.ne.s32.totalorder %s29, %s45
      %p47 = scmp.eq.s32.totalorder %s21, 0
      %p48 = por %p46, %p47
      %s50 = sadd.s32 %s49, 1
      %p53 = scmp.eq.s32.totalorder %s15, 1
      %p54 = scmp.ne.s32.totalorder %s49, %s51
      %p55 = scmp.eq.s32.totalorder %s15, 0
      %p56 = por %p54, %p55
      %p57 = scmp.ne.s32.totalorder %s49, %s51
      %p58 = scmp.eq.s32.totalorder %s20, 1
      %p59 = por %p57, %p58
      %p60 = scmp.ne.s32.totalorder %s51, %s52
      %p61 = scmp.eq.s32.totalorder %s20, 0
      %p62 = por %p60, %p61
      %p63 = scmp.ne.s32.totalorder %s51, %s52
      %p64 = scmp.eq.s32.totalorder %s21, 1
      %p65 = por %p63, %p64
      %p67 = scmp.ne.s32.totalorder %s52, %s66
      %p68 = scmp.eq.s32.totalorder %s21, 0
      %p69 = por %p67, %p68
      %s71 = sadd.s32 %s70, 1
      %p74 = scmp.eq.s32.totalorder %s15, 1
      %p75 = scmp.ne.s32.totalorder %s70, %s72
      %p76 = scmp.eq.s32.totalorder %s15, 0
      %p77 = por %p75, %p76
      %p78 = scmp.ne.s32.totalorder %s70, %s72
      %p79 = scmp.eq.s32.totalorder %s20, 1
      %p80 = por %p78, %p79
      %p81 = scmp.ne.s32.totalorder %s72, %s73
      %p82 = scmp.eq.s32.totalorder %s20, 0
      %p83 = por %p81, %p82
      %p84 = scmp.ne.s32.totalorder %s72, %s73
      %p85 = scmp.eq.s32.totalorder %s21, 1
      %p86 = por %p84, %p85
      %p88 = scmp.ne.s32.totalorder %s73, %s87
      %p89 = scmp.eq.s32.totalorder %s21, 0
      %p90 = por %p88, %p89
      %s91 = ssub.s32 %s15, %s22
      %p92 = scmp.eq.s32.totalorder %s91, 0
      %s94 = sadd.s32 %s93, 1
      %s95 = scalar_select %p92, %s93, %s94
      %p98 = pneg %p92
      %p99 = scmp.eq.s32.totalorder %s15, 1
      %p100 = por %p98, %p99
      %p101 = scmp.ne.s32.totalorder %s93, %s96
      %p102 = scmp.eq.s32.totalorder %s15, 0
      %p103 = por %p101, %p102
      %p104 = scmp.ne.s32.totalorder %s93, %s96
      %p105 = scmp.eq.s32.totalorder %s20, 1
      %p106 = por %p104, %p105
      %p107 = scmp.ne.s32.totalorder %s96, %s97
      %p108 = scmp.eq.s32.totalorder %s20, 0
      %p109 = por %p107, %p108
      %p110 = scmp.ne.s32.totalorder %s96, %s97
      %p111 = scmp.eq.s32.totalorder %s21, 1
      %p112 = por %p110, %p111
      %p114 = scmp.ne.s32.totalorder %s97, %s113
      %p115 = scmp.eq.s32.totalorder %s21, 0
      %p116 = por %p114, %p115
      %p117 = scmp.le.s32.totalorder 1, %s15
      %p118 = scmp.lt.s32.totalorder %s15, 3
      %p119 = pnand %p117, %p118
      %p120 = pneg %p119
      // Predicated region
      $region9: #{tpu_custom_call.1} parent=5 // pred_check
        _
      $region10: #{tpu_custom_call.1} parent=5 // pred_check_branch
        %122 = sbr.rel (%p119) target = $region12
      $region11: #{tpu_custom_call.1} parent=5 // pred_region
        %s123 = ssub.s32 %s15, 1
        // Predicated region
        $region13: #{tpu_custom_call.1} parent=11 // pred_check
          %p124 = pneg %p62
        $region14: #{tpu_custom_call.1} parent=11 // pred_check_branch
          %126 = sbr.rel (%p124) target = $region16
        $region15: #{tpu_custom_call.1} parent=11 // pred_region
          _
        $region16: #{tpu_custom_call.1} parent=11 // pred_fallthru
          _
        // Predicated region
        $region17: #{tpu_custom_call.1} parent=11 // pred_check
          %p127 = pneg %p83
        $region18: #{tpu_custom_call.1} parent=11 // pred_check_branch
          %129 = sbr.rel (%p127) target = $region20
        $region19: #{tpu_custom_call.1} parent=11 // pred_region
          _
        $region20: #{tpu_custom_call.1} parent=11 // pred_fallthru
          _
      $region12: #{tpu_custom_call.1} parent=5 // pred_fallthru
        _
      %p130 = scmp.lt.s32.totalorder %s15, 2
      // Predicated region
      $region21: #{tpu_custom_call.1} parent=5 // pred_check
        %p131 = pneg %p130
      $region22: #{tpu_custom_call.1} parent=5 // pred_check_branch
        %133 = sbr.rel (%p131) target = $region24
      $region23: #{tpu_custom_call.1} parent=5 // pred_region
        // Predicated region
        $region25: #{tpu_custom_call.1} parent=23 // pred_check
          %p134 = pneg %p35
        $region26: #{tpu_custom_call.1} parent=23 // pred_check_branch
          %136 = sbr.rel (%p134) target = $region28
        $region27: #{tpu_custom_call.1} parent=23 // pred_region
          %s137 = sand.u32 %s25, 1
          %s138 = scalar_lea.sflag [#allocation3], %s137
          %s139 = sand.u32 %s25, 1
          %s140 = smul.addr %s139, 32
          %s141 = scalar_lea.vmem [#allocation2], %s140
          %143 = vsyncadd %s138, 0
          %s144 = smul.addr %s15, 4
          %s145 = smul.addr %s144, 8
          %s146 = scalar_lea.hbm %s0, %s145
          %s147 = sshll.u32 %s146, 4
          %s148 = int_to_ptr.hbm [resolvable:$true] %s147
          %s149 = sshll.u32 %s141, 4
          %s150 = int_to_ptr.vmem [resolvable:$true] %s149
          %155 = dma.hbm_to_vmem [thread:$0]  %s148, 512, %s150, %s138, 256, 256, 16
        $region28: #{tpu_custom_call.1} parent=23 // pred_fallthru
          _
      $region24: #{tpu_custom_call.1} parent=5 // pred_fallthru
        _
      %p156 = scmp.le.s32.totalorder 1, %s15
      %p157 = scmp.lt.s32.totalorder %s15, 3
      %p158 = pnand %p156, %p157
      %p159 = pneg %p158
      // Predicated region
      $region29: #{tpu_custom_call.1} parent=5 // pred_check
        _
      $region30: #{tpu_custom_call.1} parent=5 // pred_check_branch
        %161 = sbr.rel (%p158) target = $region32
      $region31: #{tpu_custom_call.1} parent=5 // pred_region
        %s162 = ssub.s32 %s15, 1
        %s163 = sand.u32 %s28, 1
        %s164 = scalar_lea.sflag [#allocation3], %s163
        %s165 = sand.u32 %s28, 1
        %s166 = smul.addr %s165, 32
        %s167 = scalar_lea.vmem [#allocation2], %s166
        // Predicated region
        $region33: #{tpu_custom_call.1} parent=31 // pred_check
          %p168 = pneg %p41
        $region34: #{tpu_custom_call.1} parent=31 // pred_check_branch
          %170 = sbr.rel (%p168) target = $region36
        $region35: #{tpu_custom_call.1} parent=31 // pred_region
          %172 = dma.done %s164, 512
        $region36: #{tpu_custom_call.1} parent=31 // pred_fallthru
          _
        %s173 = sand.u32 %s28, 1
        %s174 = scalar_lea.sflag [#allocation3], %s173
        %s175 = sand.u32 %s28, 1
        %s176 = smul.addr %s175, 32
        %s177 = scalar_lea.vmem [#allocation2], %s176
        %p178 = pneg %p41
        %p179 = pneg %p38
        %p180 = pneg %p62
        %p181 = pneg %p59
        %p182 = pneg %p83
        %p183 = pneg %p80
        %p184 = pneg %p109
        %p185 = pneg %p106
        %s186 = sand.u32 %s96, 1
        %s187 = scalar_lea.sflag [#allocation4], %s186
        %s188 = sand.u32 %s96, 1
        %s189 = smul.addr %s188, 32
        %s190 = scalar_lea.vmem [#allocation5], %s189
        %v191 = vld [vmem:[%s167] sm:$0xff]
        %v192 = vld [vmem:[%s167 + $0x8] sm:$0xff]
        %v193 = vld [vmem:[%s167 + $0x10] sm:$0xff]
        %v194 = vld [vmem:[%s167 + $0x18] sm:$0xff]
        %v195 = vadd.f32 %v191, %v192
        %196 = vadd.xlane.f32.xlu0 %v195
        %v197 = vpop.xlane.xlu0 %196
        %v198 = vadd.f32 %v193, %v194
        %199 = vadd.xlane.f32.xlu0 %v198
        %v200 = vpop.xlane.xlu0 %199
        %v201 = vmul.f32 %v197, 0.00390625
        %v202 = vmul.f32 %v200, 0.00390625
        %v203 = vld [vmem:[%s1] sm:$0xff]
        %v204 = vld [vmem:[%s1 + $0x8] sm:$0xff]
        %v207 = vlaneseq
        %v208 = vand.u32 %v207, 127
        %v209 = vperm.slane %v201, %v208
        %v210 = vadd.s32 %v208, 4294967288
        %v211 = vperm.slane %v202, %v210
        %vm212 = vcmask 130112
        %v213 = vsel %vm212, %v211, %v209
        %vm214 = vcmask 130048
        %v215 = vsel %vm214, %v213, 0
        %217 = vmatpush.msra.mxu0 0.0
        %218 = vmatpush.msra.mxu0 0.0
        %219 = vmatpush.msra.mxu0 0.0
        %220 = vmatpush.msra.mxu0 0.0
        %221 = vmatpush.msra.mxu0 0.0
        %222 = vmatpush.msra.mxu0 0.0
        %223 = vmatpush.msra.mxu0 0.0
        %224 = vmatpush.msra.mxu0 0.0
        %225 = vmatpush.msra.mxu0 0.0
        %226 = vmatpush.msra.mxu0 0.0
        %227 = vmatpush.msra.mxu0 0.0
        %228 = vmatpush.msra.mxu0 0.0
        %229 = vmatpush.msra.mxu0 0.0
        %230 = vmatpush.msra.mxu0 0.0
        %231 = vmatpush.msra.mxu0 %v204
        %232 = vmatpush.msra.mxu0 %v203
        %233 = vmatmul.f32.gmra.mxu0 %v215
        %v234 = vpop.f32.mrf.mxu0
        %v235 = vadd.f32 0.0, %v234
        %236 = vdwg.mxu0
        %v237 = vxor.u32 %v235, 2147483648
        %v238 = vmul.f32 %v237, 1.442695
        %v239 = vpow.pop %v238
        %v240 = vadd.f32 %v239, 1.0
        %v241 = vrcp.pop %v240
        %v242 = vmul.f32 %v240, %v241
        %v243 = vsub.f32 1.0, %v242
        %v244 = vmul.f32 %v241, %v243
        %v245 = vadd.f32 %v241, %v244
        %vm246 = vweird.f32 %v240
        %vm247 = vweird.f32 %v241
        %vm248 = vmor %vm246, %vm247
        %v249 = vsel %vm248, %v241, %v245
        %v250 = vand.u32 2147483647, %v240
        %vm251 = vcmp.eq.f32.partialorder %v250, 8.507059e+37
        %v252 = vand.u32 %v240, 2147483648
        %v253 = vor.u32 1.1754944e-38, %v252
        %v254 = vsel %vm251, %v253, %v249
        %v255 = vmul.f32 1.0, %v254
        %v256 = vmul.f32 %v235, %v255
        %v257 = vld [vmem:[%s2] sm:$0xf]
        %vm258 = vcmask 31744
        %v260 = vsel %vm258, %v256, 0
        %vm262 = vcmask 1043456
        %v264 = vsel %vm262, %v257, 0
        %266 = vmatpush.msra.mxu0 0.0
        %267 = vmatpush.msra.mxu0 0.0
        %268 = vmatpush.msra.mxu0 0.0
        %269 = vmatpush.msra.mxu0 0.0
        %270 = vmatpush.msra.mxu0 0.0
        %271 = vmatpush.msra.mxu0 0.0
        %272 = vmatpush.msra.mxu0 0.0
        %273 = vmatpush.msra.mxu0 0.0
        %274 = vmatpush.msra.mxu0 0.0
        %275 = vmatpush.msra.mxu0 0.0
        %276 = vmatpush.msra.mxu0 0.0
        %277 = vmatpush.msra.mxu0 0.0
        %278 = vmatpush.msra.mxu0 0.0
        %279 = vmatpush.msra.mxu0 0.0
        %280 = vmatpush.msra.mxu0 0.0
        %281 = vmatpush.msra.mxu0 %v264
        %282 = vmatmul.f32.gmra.mxu0 %v260
        %v283 = vpop.f32.mrf.mxu0
        %v284 = vadd.f32 0.0, %v283
        %285 = vdwg.mxu0
        %v286 = vxor.u32 %v284, 2147483648
        %v287 = vmul.f32 %v286, 1.442695
        %v288 = vpow.pop %v287
        %v289 = vadd.f32 %v288, 1.0
        %v290 = vrcp.pop %v289
        %v291 = vmul.f32 %v289, %v290
        %v292 = vsub.f32 1.0, %v291
        %v293 = vmul.f32 %v290, %v292
        %v294 = vadd.f32 %v290, %v293
        %vm295 = vweird.f32 %v289
        %vm296 = vweird.f32 %v290
        %vm297 = vmor %vm295, %vm296
        %v298 = vsel %vm297, %v290, %v294
        %v299 = vand.u32 2147483647, %v289
        %vm300 = vcmp.eq.f32.partialorder %v299, 8.507059e+37
        %v301 = vand.u32 %v289, 2147483648
        %v302 = vor.u32 1.1754944e-38, %v301
        %v303 = vsel %vm300, %v302, %v298
        %v304 = vmul.f32 1.0, %v303
        %v305 = vperm.slane %v304, 0
        %v306 = vlaneseq
        %v307 = vshrl.u32 %v306, 7
        %309 = vset.pattern.permute.xlu0 %v307
        %310 = vperm.xlu0 %309, %v305
        %v311 = vpop.permute.xlu0 %310
        %v312 = vlaneseq
        %v313 = vshrl.u32 %v312, 7
        %v314 = vadd.s32 %v313, 8
        %315 = vset.pattern.permute.xlu0 %v314
        %316 = vperm.xlu0 %315, %v305
        %v317 = vpop.permute.xlu0 %316
        %v318 = vmul.f32 %v191, %v311
        %v319 = vmul.f32 %v192, %v311
        %v320 = vmul.f32 %v193, %v317
        %v321 = vmul.f32 %v194, %v317
        %322 = vst [vmem:[%s190] sm:$0xff] %v318
        %323 = vst [vmem:[%s190 + $0x8] sm:$0xff] %v319
        %324 = vst [vmem:[%s190 + $0x10] sm:$0xff] %v320
        %325 = vst [vmem:[%s190 + $0x18] sm:$0xff] %v321
        %s326 = sand.u32 %s96, 1
        %s327 = scalar_lea.sflag [#allocation4], %s326
        %s328 = sand.u32 %s96, 1
        %s329 = smul.addr %s328, 32
        %s330 = scalar_lea.vmem [#allocation5], %s329
        // Predicated region
        $region37: #{tpu_custom_call.1} parent=31 // pred_check
          %p331 = pneg %p106
        $region38: #{tpu_custom_call.1} parent=31 // pred_check_branch
          %333 = sbr.rel (%p331) target = $region40
        $region39: #{tpu_custom_call.1} parent=31 // pred_region
          %335 = vsyncadd %s327, 0
          %s336 = smul.addr %s20, 4
          %s337 = smul.addr %s336, 8
          %s338 = scalar_lea.hbm %s3, %s337
          %s339 = sshll.u32 %s330, 4
          %s340 = int_to_ptr.vmem [resolvable:$true] %s339
          %s341 = sshll.u32 %s338, 4
          %s342 = int_to_ptr.hbm [resolvable:$true] %s341
          %347 = dma.vmem_to_hbm [thread:$0]  %s340, 512, %s342, %s327, 256, 256, 16
        $region40: #{tpu_custom_call.1} parent=31 // pred_fallthru
          _
      $region32: #{tpu_custom_call.1} parent=5 // pred_fallthru
        _
      %p348 = scmp.le.s32.totalorder 2, %s15
      // Predicated region
      $region41: #{tpu_custom_call.1} parent=5 // pred_check
        %p349 = pneg %p348
      $region42: #{tpu_custom_call.1} parent=5 // pred_check_branch
        %351 = sbr.rel (%p349) target = $region44
      $region43: #{tpu_custom_call.1} parent=5 // pred_region
        %s352 = ssub.s32 %s15, 2
        // Predicated region
        $region45: #{tpu_custom_call.1} parent=43 // pred_check
          %p353 = pneg %p112
        $region46: #{tpu_custom_call.1} parent=43 // pred_check_branch
          %355 = sbr.rel (%p353) target = $region48
        $region47: #{tpu_custom_call.1} parent=43 // pred_region
          %s356 = sand.u32 %s97, 1
          %s357 = scalar_lea.sflag [#allocation4], %s356
          %s358 = sand.u32 %s97, 1
          %s359 = smul.addr %s358, 32
          %s360 = scalar_lea.vmem [#allocation5], %s359
          %362 = dma.done %s357, 512
        $region48: #{tpu_custom_call.1} parent=43 // pred_fallthru
          _
      $region44: #{tpu_custom_call.1} parent=5 // pred_fallthru
        _
    $region6: #{tpu_custom_call.1} parent=1 // loop_footer
      %s19 = sadd.s32 1, %s15
    $region7: #{tpu_custom_call.1} parent=1 // loop_footer_branch
      %14 = sbr.rel target = $region3
    $region8: #{tpu_custom_call.1} parent=1 // loop_exit
      _
    %363 = vsyncpa [#allocation3], 1
    %s364 = scalar_lea.sflag [#allocation3], 1
    %365 = vsyncpa %s364, 1
    %366 = vsyncpa [#allocation4], 1
    %s367 = scalar_lea.sflag [#allocation4], 1
    %368 = vsyncpa %s367, 1

</llo_original>
